<compile_context>
chip_gen: v7x
topology: tpu7x:2x2x1
jax: 0.10.0
libtpu: 0.0.40
codegen_flags: <defaults>
</compile_context>

<pallas_src>
import jax
import jax.numpy as jnp
from jax.experimental import pallas as pl
from jax.experimental.pallas import tpu as pltpu


def edge_cnn_kernel(x_ref, w1t_ref, b1_ref, w2t_ref, b2_ref, o_ref):
    # x_ref:   (Cin,  TE)   channel-major edge tile
    # w1t_ref: (Cout, Cin)  conv1 weight, transposed for left-multiply
    # b1_ref:  (Cout, 1)
    # w2t_ref: (Cout, Cout)
    # b2_ref:  (Cout, 1)
    # o_ref:   (Cout, TE)
    h = jnp.dot(w1t_ref[...], x_ref[...], preferred_element_type=jnp.float32)
    h = h + b1_ref[...]

    # softmax over the channel axis (PyTorch softmax(dim=1) on the (1, C, E)
    # tensor == axis 0 in this channel-major layout).
    m = jnp.max(h, axis=0, keepdims=True)
    e = jnp.exp(h - m)
    denom = jnp.sum(e, axis=0, keepdims=True)
    s = e * pl.reciprocal(denom, approx=True)  # EUP divide, ~free when mem-bound

    y = jnp.dot(w2t_ref[...], s, preferred_element_type=jnp.float32)
    y = y + b2_ref[...]
    o_ref[...] = y.astype(o_ref.dtype)


def _choose_tile(num_edges, tile_e):
    """Pick a lane-aligned (multiple of 128) edge tile and padded edge count."""
    e128 = ((num_edges + 127) // 128) * 128
    tile = max(128, min(tile_e, e128))
    tile = (tile // 128) * 128
    # Keep >= 2 grid steps whenever possible so v7x's two TensorCores both
    # get work under dimension_semantics=("parallel",).
    if e128 // tile < 2 and e128 >= 256:
        tile = max(128, ((e128 // 2) // 128) * 128)
    e_pad = ((num_edges + tile - 1) // tile) * tile
    return tile, e_pad


def edge_cnn_forward(edge_attr, w1, b1, w2, b2, *, tile_e=8192):
    """edge_attr: (E, Cin) f32 -> (E, Cout) f32, matching EdgeCNN.forward
    for a 2-D edge_attr (permute/unsqueeze -> conv1 -> softmax(dim=1) ->
    conv2 -> squeeze/permute).

    w1: (Cin, Cout), b1: (Cout,), w2: (Cout, Cout), b2: (Cout,)
    (PyTorch Conv1d stores weights as (out, in, 1); here they are pre-laid-out
     as (in, out) matrices.)
    """
    E, cin = edge_attr.shape
    cout = w1.shape[1]

    tile, e_pad = _choose_tile(E, tile_e)

    # Channel-major input; pad edges (lanes) to a multiple of the tile.
    x_cm = edge_attr.T  # (Cin, E)
    if e_pad != E:
        x_cm = jnp.pad(x_cm, ((0, 0), (0, e_pad - E)))

    w1t = w1.T                    # (Cout, Cin)
    w2t = w2.T                    # (Cout, Cout)
    b1c = b1.reshape(cout, 1)
    b2c = b2.reshape(cout, 1)

    grid = (e_pad // tile,)

    out_cm = pl.pallas_call(
        edge_cnn_kernel,
        out_shape=jax.ShapeDtypeStruct((cout, e_pad), edge_attr.dtype),
        grid_spec=pltpu.PrefetchScalarGridSpec(
            num_scalar_prefetch=0,
            grid=grid,
            in_specs=[
                pl.BlockSpec((cin, tile), lambda i: (0, i)),    # x tile (streams)
                pl.BlockSpec((cout, cin), lambda i: (0, 0)),    # W1^T (resident)
                pl.BlockSpec((cout, 1), lambda i: (0, 0)),      # b1
                pl.BlockSpec((cout, cout), lambda i: (0, 0)),   # W2^T (resident)
                pl.BlockSpec((cout, 1), lambda i: (0, 0)),      # b2
            ],
            out_specs=pl.BlockSpec((cout, tile), lambda i: (0, i)),
        ),
        compiler_params=pltpu.CompilerParams(
            dimension_semantics=("parallel",),
        ),
        # TODO(synk): if profiling shows exposed DMA after the tile bump, add
        # pipeline_mode=pl.Buffered(3) to the x BlockSpec.
    )(x_cm, w1t, b1c, w2t, b2c)

    # Drop edge padding and go back to edge-major (E, Cout).
    return out_cm[:, :E].T


def edge_cnn_reference(edge_attr, w1, b1, w2, b2):
    """Plain-JAX reference mirroring the PyTorch forward exactly."""
    x = edge_attr.T[None, :, :]                                  # (1, Cin, E)
    h = jnp.einsum("oc,bce->boe", w1.T, x) + b1[None, :, None]   # conv1 (k=1)
    h = jax.nn.softmax(h, axis=1)
    y = jnp.einsum("oc,bce->boe", w2.T, h) + b2[None, :, None]   # conv2 (k=1)
    return y[0].T                                                # (E, Cout)


if __name__ == "__main__":
    key = jax.random.PRNGKey(0)
    k_x, k_w1, k_b1, k_w2, k_b2 = jax.random.split(key, 5)

    E = 300            # number of edges (non-multiple of 128: exercises padding)
    in_channels = 8
    out_channels = 16

    edge_attr = jax.random.normal(k_x, (E, in_channels), dtype=jnp.float32)
    w1 = jax.random.normal(k_w1, (in_channels, out_channels), dtype=jnp.float32) * 0.1
    b1 = jax.random.normal(k_b1, (out_channels,), dtype=jnp.float32) * 0.1
    w2 = jax.random.normal(k_w2, (out_channels, out_channels), dtype=jnp.float32) * 0.1
    b2 = jax.random.normal(k_b2, (out_channels,), dtype=jnp.float32) * 0.1

    out = edge_cnn_forward(edge_attr, w1, b1, w2, b2)
    out = jax.block_until_ready(out)

    ref = edge_cnn_reference(edge_attr, w1, b1, w2, b2)
    assert out.shape == (E, out_channels)
    # Tolerance relaxed vs 1e-5 because the softmax normalizer uses the EUP
    # approximate reciprocal (~1e-3-level relative error, per perf review).
    assert jnp.all(jnp.isfinite(out)), "non-finite output"
    assert jnp.allclose(out, ref, atol=2e-3, rtol=2e-3), "mismatch vs reference"

    print("KERNEL_OK")
</pallas_src>

<mosaic_0001>
module attributes {stable_mosaic.version = 11 : i64} {
  func.func @edge_cnn_kernel(%arg0: i32, %arg1: memref<8x128xf32, #tpu.memory_space<vmem>>, %arg2: memref<16x8xf32, #tpu.memory_space<vmem>>, %arg3: memref<16x1xf32, #tpu.memory_space<vmem>>, %arg4: memref<16x16xf32, #tpu.memory_space<vmem>>, %arg5: memref<16x1xf32, #tpu.memory_space<vmem>>, %arg6: memref<16x128xf32, #tpu.memory_space<vmem>>) attributes {dimension_semantics = [#tpu.dimension_semantics<parallel>], iteration_bounds = array<i64: 3>, scalar_prefetch = 0 : i64, scratch_operands = 0 : i64, tpu.core_type = #tpu.core_type<tc>, window_params = [{transform_indices = @transform_0, window_bounds = array<i64: 8, 128>}, {pipeline_mode = #tpu.pipeline_mode<synchronous>, transform_indices = @transform_1, window_bounds = array<i64: 16, 8>}, {pipeline_mode = #tpu.pipeline_mode<synchronous>, transform_indices = @transform_2, window_bounds = array<i64: 16, 1>}, {pipeline_mode = #tpu.pipeline_mode<synchronous>, transform_indices = @transform_3, window_bounds = array<i64: 16, 16>}, {pipeline_mode = #tpu.pipeline_mode<synchronous>, transform_indices = @transform_4, window_bounds = array<i64: 16, 1>}, {transform_indices = @transform_5, window_bounds = array<i64: 16, 128>}]} {
    %c0 = arith.constant 0 : index
    %c0_0 = arith.constant 0 : index
    %0 = vector.load %arg2[%c0, %c0_0] : memref<16x8xf32, #tpu.memory_space<vmem>>, vector<16x8xf32>
    %c0_1 = arith.constant 0 : index
    %c0_2 = arith.constant 0 : index
    %1 = vector.load %arg1[%c0_1, %c0_2] : memref<8x128xf32, #tpu.memory_space<vmem>>, vector<8x128xf32>
    %cst = arith.constant dense<0.000000e+00> : vector<16x128xf32>
    %2 = tpu.matmul %0, %1, %cst {dimension_numbers = #tpu.dot_dimension_numbers<[1], [0], [0], [1], [0, 0, 1, 1], [], []>} : vector<16x8xf32>, vector<8x128xf32>, vector<16x128xf32> -> vector<16x128xf32>
    %c0_3 = arith.constant 0 : index
    %c0_4 = arith.constant 0 : index
    %3 = vector.load %arg3[%c0_3, %c0_4] : memref<16x1xf32, #tpu.memory_space<vmem>>, vector<16x1xf32>
    %4 = vector.broadcast %3 : vector<16x1xf32> to vector<16x128xf32>
    %5 = arith.addf %2, %4 : vector<16x128xf32>
    %cst_5 = arith.constant dense<0xFF800000> : vector<128xf32>
    %6 = vector.multi_reduction <maximumf>, %5, %cst_5 [0] : vector<16x128xf32> to vector<128xf32>
    %7 = vector.shape_cast %6 : vector<128xf32> to vector<1x128xf32>
    %8 = vector.broadcast %7 : vector<1x128xf32> to vector<16x128xf32>
    %9 = arith.subf %5, %8 : vector<16x128xf32>
    %10 = math.exp %9 : vector<16x128xf32>
    %cst_6 = arith.constant dense<0.000000e+00> : vector<128xf32>
    %11 = vector.multi_reduction <add>, %10, %cst_6 [0] : vector<16x128xf32> to vector<128xf32>
    %12 = vector.shape_cast %11 : vector<128xf32> to vector<1x128xf32>
    %13 = tpu.reciprocal %12 {approx = true} : vector<1x128xf32> -> vector<1x128xf32>
    %14 = vector.broadcast %13 : vector<1x128xf32> to vector<16x128xf32>
    %15 = arith.mulf %10, %14 : vector<16x128xf32>
    %c0_7 = arith.constant 0 : index
    %c0_8 = arith.constant 0 : index
    %16 = vector.load %arg4[%c0_7, %c0_8] : memref<16x16xf32, #tpu.memory_space<vmem>>, vector<16x16xf32>
    %cst_9 = arith.constant dense<0.000000e+00> : vector<16x128xf32>
    %17 = tpu.matmul %16, %15, %cst_9 {dimension_numbers = #tpu.dot_dimension_numbers<[1], [0], [0], [1], [0, 0, 1, 1], [], []>} : vector<16x16xf32>, vector<16x128xf32>, vector<16x128xf32> -> vector<16x128xf32>
    %c0_10 = arith.constant 0 : index
    %c0_11 = arith.constant 0 : index
    %18 = vector.load %arg5[%c0_10, %c0_11] : memref<16x1xf32, #tpu.memory_space<vmem>>, vector<16x1xf32>
    %19 = vector.broadcast %18 : vector<16x1xf32> to vector<16x128xf32>
    %20 = arith.addf %17, %19 : vector<16x128xf32>
    %c0_12 = arith.constant 0 : index
    %c0_13 = arith.constant 0 : index
    %21 = vector.load %arg6[%c0_12, %c0_13] : memref<16x128xf32, #tpu.memory_space<vmem>>, vector<16x128xf32>
    tpu.vector_store %arg6[%c0_12, %c0_13], %20 {strides = array<i32>} : memref<16x128xf32, #tpu.memory_space<vmem>>, vector<16x128xf32>,
    return
  }
  func.func @transform_0(%arg0: i32) -> (i32, i32) {
    %c0_i32 = arith.constant 0 : i32
    %c0_i32_0 = arith.constant 0 : i32
    return %c0_i32, %arg0 : i32, i32
  }
  func.func @transform_1(%arg0: i32) -> (i32, i32) {
    %c0_i32 = arith.constant 0 : i32
    %c0_i32_0 = arith.constant 0 : i32
    %c0_i32_1 = arith.constant 0 : i32
    return %c0_i32, %c0_i32_0 : i32, i32
  }
  func.func @transform_2(%arg0: i32) -> (i32, i32) {
    %c0_i32 = arith.constant 0 : i32
    %c0_i32_0 = arith.constant 0 : i32
    %c0_i32_1 = arith.constant 0 : i32
    return %c0_i32, %c0_i32_0 : i32, i32
  }
  func.func @transform_3(%arg0: i32) -> (i32, i32) {
    %c0_i32 = arith.constant 0 : i32
    %c0_i32_0 = arith.constant 0 : i32
    %c0_i32_1 = arith.constant 0 : i32
    return %c0_i32, %c0_i32_0 : i32, i32
  }
  func.func @transform_4(%arg0: i32) -> (i32, i32) {
    %c0_i32 = arith.constant 0 : i32
    %c0_i32_0 = arith.constant 0 : i32
    %c0_i32_1 = arith.constant 0 : i32
    return %c0_i32, %c0_i32_0 : i32, i32
  }
  func.func @transform_5(%arg0: i32) -> (i32, i32) {
    %c0_i32 = arith.constant 0 : i32
    %c0_i32_0 = arith.constant 0 : i32
    return %c0_i32, %arg0 : i32, i32
  }
}

</mosaic_0001>

<llo_original>
// kernel: tpu_custom_call.1
$region0: #{tpu_custom_call.1}
  #allocation0 [shape = 'u32[]', space=smem, size = 0x4, offset = 0x4, fixed_abs, tag = 'smem constant byte address 0x4 - core index']
  #allocation1 [shape = 'u32[144,128]{1,0:T(1,128)}', space=vmem, size = 0x12000, scoped, tag = 'internal scratch']
  %s0 = inlined_call_operand.vmem [shape: f32[8,384], index: 0, kind: input, shape index: {}]
  %s1 = inlined_call_operand.vmem [shape: f32[16,8], index: 1, kind: input, shape index: {}]
  %s2 = inlined_call_operand.vmem [shape: f32[16,1], index: 2, kind: input, shape index: {}]
  %s3 = inlined_call_operand.vmem [shape: f32[16,16], index: 3, kind: input, shape index: {}]
  %s4 = inlined_call_operand.vmem [shape: f32[16,1], index: 4, kind: input, shape index: {}]
  %s5 = inlined_call_operand.hbm [shape: f32[16,384], index: 5, kind: output, shape index: {}]
  %s6 = sld [smem:[#allocation0]]
  $region53: #{tpu_custom_call.1} parent=0
    _
  %s8 = ssub.s32 1, %s6
  %s9 = scalar_select 0, %s8, %s6
  $region1: #{tpu_custom_call.1} parent=0
    #allocation2 [shape = 'u8[16384]{0}', space=vmem, size = 0x4000, scoped, tag = 'output window, operand 0']
    #allocation3 [shape = 's32[2]{0}', space=sflag, size = 0x8, scoped, tag = 'scoped memory for tpu_custom_call.1']
    %10 = vsyncpa [#allocation3], 0
    %s11 = scalar_lea.sflag [#allocation3], 1
    %12 = vsyncpa %s11, 0
    loop: start=0, step=1, limit=5
    $region2: #{tpu_custom_call.1} parent=1 // loop_pre_header
      _
    $region3: #{tpu_custom_call.1} parent=1 // loop_header
      %s14 = sphi 0, %s18
      %p15 = scmp.ge.s32.totalorder %s14, 5
      %s24 = sphi 0, %s26
      %s27 = sphi 0, %s24
      %s28 = sphi 0, %s27
      %s44 = sphi 0, %s28
      %s48 = sphi 0, %s48
      %s50 = sphi 0, %s48
      %s51 = sphi 0, %s50
      %s65 = sphi 0, %s51
      %s69 = sphi 0, %s69
      %s71 = sphi 0, %s69
      %s72 = sphi 0, %s71
      %s86 = sphi 0, %s72
      %s90 = sphi 0, %s90
      %s92 = sphi 0, %s90
      %s93 = sphi 0, %s92
      %s107 = sphi 0, %s93
      %s111 = sphi 0, %s111
      %s113 = sphi 0, %s111
      %s114 = sphi 0, %s113
      %s128 = sphi 0, %s114
      %s134 = sphi 0, %s136
      %s137 = sphi 0, %s134
      %s138 = sphi 0, %s137
      %s154 = sphi 0, %s138
    $region4: #{tpu_custom_call.1} parent=1 // loop_header_branch
      %17 = sbr.rel (%p15) target = $region8
    $region5: #{tpu_custom_call.1} parent=1 // loop_body
      %s19 = ssub.s32 %s14, 1
      %s20 = ssub.s32 %s14, 2
      %s21 = sadd.s32 %s14, 1
      %s22 = ssub.s32 %s14, %s21
      %p23 = scmp.eq.s32.totalorder %s22, 0
      %s25 = sadd.s32 %s24, 1
      %s26 = scalar_select %p23, %s24, %s25
      %p29 = pneg %p23
      %p30 = scmp.eq.s32.totalorder %s14, 2
      %p31 = por %p29, %p30
      %p32 = scmp.ne.s32.totalorder %s24, %s27
      %p33 = scmp.eq.s32.totalorder %s14, 0
      %p34 = por %p32, %p33
      %p35 = scmp.ne.s32.totalorder %s24, %s27
      %p36 = scmp.eq.s32.totalorder %s19, 2
      %p37 = por %p35, %p36
      %p38 = scmp.ne.s32.totalorder %s27, %s28
      %p39 = scmp.eq.s32.totalorder %s19, 0
      %p40 = por %p38, %p39
      %p41 = scmp.ne.s32.totalorder %s27, %s28
      %p42 = scmp.eq.s32.totalorder %s20, 2
      %p43 = por %p41, %p42
      %p45 = scmp.ne.s32.totalorder %s28, %s44
      %p46 = scmp.eq.s32.totalorder %s20, 0
      %p47 = por %p45, %p46
      %s49 = sadd.s32 %s48, 1
      %p52 = scmp.eq.s32.totalorder %s14, 2
      %p53 = scmp.ne.s32.totalorder %s48, %s50
      %p54 = scmp.eq.s32.totalorder %s14, 0
      %p55 = por %p53, %p54
      %p56 = scmp.ne.s32.totalorder %s48, %s50
      %p57 = scmp.eq.s32.totalorder %s19, 2
      %p58 = por %p56, %p57
      %p59 = scmp.ne.s32.totalorder %s50, %s51
      %p60 = scmp.eq.s32.totalorder %s19, 0
      %p61 = por %p59, %p60
      %p62 = scmp.ne.s32.totalorder %s50, %s51
      %p63 = scmp.eq.s32.totalorder %s20, 2
      %p64 = por %p62, %p63
      %p66 = scmp.ne.s32.totalorder %s51, %s65
      %p67 = scmp.eq.s32.totalorder %s20, 0
      %p68 = por %p66, %p67
      %s70 = sadd.s32 %s69, 1
      %p73 = scmp.eq.s32.totalorder %s14, 2
      %p74 = scmp.ne.s32.totalorder %s69, %s71
      %p75 = scmp.eq.s32.totalorder %s14, 0
      %p76 = por %p74, %p75
      %p77 = scmp.ne.s32.totalorder %s69, %s71
      %p78 = scmp.eq.s32.totalorder %s19, 2
      %p79 = por %p77, %p78
      %p80 = scmp.ne.s32.totalorder %s71, %s72
      %p81 = scmp.eq.s32.totalorder %s19, 0
      %p82 = por %p80, %p81
      %p83 = scmp.ne.s32.totalorder %s71, %s72
      %p84 = scmp.eq.s32.totalorder %s20, 2
      %p85 = por %p83, %p84
      %p87 = scmp.ne.s32.totalorder %s72, %s86
      %p88 = scmp.eq.s32.totalorder %s20, 0
      %p89 = por %p87, %p88
      %s91 = sadd.s32 %s90, 1
      %p94 = scmp.eq.s32.totalorder %s14, 2
      %p95 = scmp.ne.s32.totalorder %s90, %s92
      %p96 = scmp.eq.s32.totalorder %s14, 0
      %p97 = por %p95, %p96
      %p98 = scmp.ne.s32.totalorder %s90, %s92
      %p99 = scmp.eq.s32.totalorder %s19, 2
      %p100 = por %p98, %p99
      %p101 = scmp.ne.s32.totalorder %s92, %s93
      %p102 = scmp.eq.s32.totalorder %s19, 0
      %p103 = por %p101, %p102
      %p104 = scmp.ne.s32.totalorder %s92, %s93
      %p105 = scmp.eq.s32.totalorder %s20, 2
      %p106 = por %p104, %p105
      %p108 = scmp.ne.s32.totalorder %s93, %s107
      %p109 = scmp.eq.s32.totalorder %s20, 0
      %p110 = por %p108, %p109
      %s112 = sadd.s32 %s111, 1
      %p115 = scmp.eq.s32.totalorder %s14, 2
      %p116 = scmp.ne.s32.totalorder %s111, %s113
      %p117 = scmp.eq.s32.totalorder %s14, 0
      %p118 = por %p116, %p117
      %p119 = scmp.ne.s32.totalorder %s111, %s113
      %p120 = scmp.eq.s32.totalorder %s19, 2
      %p121 = por %p119, %p120
      %p122 = scmp.ne.s32.totalorder %s113, %s114
      %p123 = scmp.eq.s32.totalorder %s19, 0
      %p124 = por %p122, %p123
      %p125 = scmp.ne.s32.totalorder %s113, %s114
      %p126 = scmp.eq.s32.totalorder %s20, 2
      %p127 = por %p125, %p126
      %p129 = scmp.ne.s32.totalorder %s114, %s128
      %p130 = scmp.eq.s32.totalorder %s20, 0
      %p131 = por %p129, %p130
      %s132 = ssub.s32 %s14, %s21
      %p133 = scmp.eq.s32.totalorder %s132, 0
      %s135 = sadd.s32 %s134, 1
      %s136 = scalar_select %p133, %s134, %s135
      %p139 = pneg %p133
      %p140 = scmp.eq.s32.totalorder %s14, 2
      %p141 = por %p139, %p140
      %p142 = scmp.ne.s32.totalorder %s134, %s137
      %p143 = scmp.eq.s32.totalorder %s14, 0
      %p144 = por %p142, %p143
      %p145 = scmp.ne.s32.totalorder %s134, %s137
      %p146 = scmp.eq.s32.totalorder %s19, 2
      %p147 = por %p145, %p146
      %p148 = scmp.ne.s32.totalorder %s137, %s138
      %p149 = scmp.eq.s32.totalorder %s19, 0
      %p150 = por %p148, %p149
      %p151 = scmp.ne.s32.totalorder %s137, %s138
      %p152 = scmp.eq.s32.totalorder %s20, 2
      %p153 = por %p151, %p152
      %p155 = scmp.ne.s32.totalorder %s138, %s154
      %p156 = scmp.eq.s32.totalorder %s20, 0
      %p157 = por %p155, %p156
      %p158 = scmp.le.s32.totalorder 1, %s14
      %p159 = scmp.lt.s32.totalorder %s14, 4
      %p160 = pnand %p158, %p159
      %p161 = pneg %p160
      // Predicated region
      $region9: #{tpu_custom_call.1} parent=5 // pred_check
        _
      $region10: #{tpu_custom_call.1} parent=5 // pred_check_branch
        %163 = sbr.rel (%p160) target = $region12
      $region11: #{tpu_custom_call.1} parent=5 // pred_region
        %s164 = ssub.s32 %s14, 1
        // Predicated region
        $region13: #{tpu_custom_call.1} parent=11 // pred_check
          %p165 = pneg %p61
        $region14: #{tpu_custom_call.1} parent=11 // pred_check_branch
          %167 = sbr.rel (%p165) target = $region16
        $region15: #{tpu_custom_call.1} parent=11 // pred_region
          _
        $region16: #{tpu_custom_call.1} parent=11 // pred_fallthru
          _
        // Predicated region
        $region17: #{tpu_custom_call.1} parent=11 // pred_check
          %p168 = pneg %p82
        $region18: #{tpu_custom_call.1} parent=11 // pred_check_branch
          %170 = sbr.rel (%p168) target = $region20
        $region19: #{tpu_custom_call.1} parent=11 // pred_region
          _
        $region20: #{tpu_custom_call.1} parent=11 // pred_fallthru
          _
        // Predicated region
        $region21: #{tpu_custom_call.1} parent=11 // pred_check
          %p171 = pneg %p103
        $region22: #{tpu_custom_call.1} parent=11 // pred_check_branch
          %173 = sbr.rel (%p171) target = $region24
        $region23: #{tpu_custom_call.1} parent=11 // pred_region
          _
        $region24: #{tpu_custom_call.1} parent=11 // pred_fallthru
          _
        // Predicated region
        $region25: #{tpu_custom_call.1} parent=11 // pred_check
          %p174 = pneg %p124
        $region26: #{tpu_custom_call.1} parent=11 // pred_check_branch
          %176 = sbr.rel (%p174) target = $region28
        $region27: #{tpu_custom_call.1} parent=11 // pred_region
          _
        $region28: #{tpu_custom_call.1} parent=11 // pred_fallthru
          _
      $region12: #{tpu_custom_call.1} parent=5 // pred_fallthru
        _
      %p177 = scmp.lt.s32.totalorder %s14, 3
      // Predicated region
      $region29: #{tpu_custom_call.1} parent=5 // pred_check
        %p178 = pneg %p177
      $region30: #{tpu_custom_call.1} parent=5 // pred_check_branch
        %180 = sbr.rel (%p178) target = $region32
      $region31: #{tpu_custom_call.1} parent=5 // pred_region
        // Predicated region
        $region33: #{tpu_custom_call.1} parent=31 // pred_check
          %p181 = pneg %p34
        $region34: #{tpu_custom_call.1} parent=31 // pred_check_branch
          %183 = sbr.rel (%p181) target = $region36
        $region35: #{tpu_custom_call.1} parent=31 // pred_region
          %p184 = scmp.lt.s32.totalorder %s14, 2
          %s185 = scalar_select %p184, %s14, 2
          %s186 = smul.addr %s185, 8
          %s187 = scalar_lea.vmem %s0, %s186
        $region36: #{tpu_custom_call.1} parent=31 // pred_fallthru
          _
      $region32: #{tpu_custom_call.1} parent=5 // pred_fallthru
        _
      %p188 = scmp.le.s32.totalorder 1, %s14
      %p189 = scmp.lt.s32.totalorder %s14, 4
      %p190 = pnand %p188, %p189
      %p191 = pneg %p190
      // Predicated region
      $region37: #{tpu_custom_call.1} parent=5 // pred_check
        _
      $region38: #{tpu_custom_call.1} parent=5 // pred_check_branch
        %193 = sbr.rel (%p190) target = $region40
      $region39: #{tpu_custom_call.1} parent=5 // pred_region
        %s194 = ssub.s32 %s14, 1
        %p195 = scmp.lt.s32.totalorder %s19, 2
        %s196 = scalar_select %p195, %s19, 2
        %s197 = smul.addr %s196, 8
        %s198 = scalar_lea.vmem %s0, %s197
        %p199 = pneg %p40
        %p200 = pneg %p37
        %p201 = pneg %p61
        %p202 = pneg %p58
        %p203 = pneg %p82
        %p204 = pneg %p79
        %p205 = pneg %p103
        %p206 = pneg %p100
        %p207 = pneg %p124
        %p208 = pneg %p121
        %p209 = pneg %p150
        %p210 = pneg %p147
        %s211 = sand.u32 %s137, 1
        %s212 = scalar_lea.sflag [#allocation3], %s211
        %s213 = sand.u32 %s137, 1
        %s214 = smul.addr %s213, 16
        %s215 = scalar_lea.vmem [#allocation2], %s214
        %p216 = scmp.lt.s32.totalorder %s19, 2
        %s217 = scalar_select %p216, %s19, 2
        %s218 = smul.addr %s217, 8
        %s219 = scalar_lea.vmem %s0, %s218
        %v220 = vld [vmem:[%s1] sm:$0xff]
        %v221 = vld [vmem:[%s1 + $0x8] sm:$0xff]
        %v222 = vld [vmem:[%s219] sm:$0xff]
        %v223 = vld [vmem:[%s2] sm:$0xff]
        %v224 = vld [vmem:[%s2 + $0x8] sm:$0xff]
        %226 = vset.pattern.permute.xlu0 0
        %227 = vperm.xlu0 %226, %v223
        %v228 = vpop.permute.xlu0 %227
        %231 = vset.pattern.permute.xlu0 0
        %232 = vperm.xlu0 %231, %v224
        %v233 = vpop.permute.xlu0 %232
        %vm235 = vcmask 64512
        %v237 = vsel %vm235, %v220, 0
        %v240 = vsel %vm235, %v221, 0
        %242 = vmatprep.subr.mxu0 0.0
        %243 = vmatpush1.msra.mxu0 %v222
        %244 = vmatprep.subr.mxu0 0.0
        %245 = vmatpush1.msra.mxu0 0.0
        %246 = vmatprep.subr.mxu0 0.0
        %247 = vmatpush1.msra.mxu0 0.0
        %248 = vmatprep.subr.mxu0 0.0
        %249 = vmatpush1.msra.mxu0 0.0
        %250 = vmatprep.subr.mxu0 0.0
        %251 = vmatpush1.msra.mxu0 0.0
        %252 = vmatprep.subr.mxu0 0.0
        %253 = vmatpush1.msra.mxu0 0.0
        %254 = vmatprep.subr.mxu0 0.0
        %255 = vmatpush1.msra.mxu0 0.0
        %256 = vmatprep.subr.mxu0 0.0
        %257 = vmatpush1.msra.mxu0 0.0
        %258 = vmatprep.subr.mxu0 0.0
        %259 = vmatpush1.msra.mxu0 0.0
        %260 = vmatprep.subr.mxu0 0.0
        %261 = vmatpush1.msra.mxu0 0.0
        %262 = vmatprep.subr.mxu0 0.0
        %263 = vmatpush1.msra.mxu0 0.0
        %264 = vmatprep.subr.mxu0 0.0
        %265 = vmatpush1.msra.mxu0 0.0
        %266 = vmatprep.subr.mxu0 0.0
        %267 = vmatpush1.msra.mxu0 0.0
        %268 = vmatprep.subr.mxu0 0.0
        %269 = vmatpush1.msra.mxu0 0.0
        %270 = vmatprep.subr.mxu0 0.0
        %271 = vmatpush1.msra.mxu0 0.0
        %272 = vmatprep.subr.mxu0 0.0
        %273 = vmatpush1.msra.mxu0 0.0
        %274 = vmatprep.subr.mxu0 0.0
        %275 = vmatpush1.msra.mxu0 0.0
        %276 = vmatprep.subr.mxu0 0.0
        %277 = vmatpush1.msra.mxu0 0.0
        %278 = vmatprep.subr.mxu0 0.0
        %279 = vmatpush1.msra.mxu0 0.0
        %280 = vmatprep.subr.mxu0 0.0
        %281 = vmatpush1.msra.mxu0 0.0
        %282 = vmatprep.subr.mxu0 0.0
        %283 = vmatpush1.msra.mxu0 0.0
        %284 = vmatprep.subr.mxu0 0.0
        %285 = vmatpush1.msra.mxu0 0.0
        %286 = vmatprep.subr.mxu0 0.0
        %287 = vmatpush1.msra.mxu0 0.0
        %288 = vmatprep.subr.mxu0 0.0
        %289 = vmatpush1.msra.mxu0 0.0
        %290 = vmatprep.subr.mxu0 0.0
        %291 = vmatpush1.msra.mxu0 0.0
        %292 = vmatprep.subr.mxu0 0.0
        %293 = vmatpush1.msra.mxu0 0.0
        %294 = vmatprep.subr.mxu0 0.0
        %295 = vmatpush1.msra.mxu0 0.0
        %296 = vmatprep.subr.mxu0 0.0
        %297 = vmatpush1.msra.mxu0 0.0
        %298 = vmatprep.subr.mxu0 0.0
        %299 = vmatpush1.msra.mxu0 0.0
        %300 = vmatprep.subr.mxu0 0.0
        %301 = vmatpush1.msra.mxu0 0.0
        %302 = vmatprep.subr.mxu0 0.0
        %303 = vmatpush1.msra.mxu0 0.0
        %304 = vmatprep.subr.mxu0 0.0
        %305 = vmatpush1.msra.mxu0 0.0
        %306 = vmatprep.mubr.f32.mxu0 0.0
        %307 = vmatmul.mubr.f32.gmra.mrb[0].mxu0 %v237
        %v308 = vpop.f32.mrb[0].mxu0
        %v309 = vadd.f32 %v228, %v308
        %v310 = vpop.f32.mrb[0].mxu0
        %311 = vmatprep.mubr.f32.mxu0 0.0
        %312 = vmatmul.mubr.f32.gmra.mrb[0].mxu0 %v240
        %v313 = vpop.f32.mrb[0].mxu0
        %v314 = vadd.f32 %v233, %v313
        %v315 = vpop.f32.mrb[0].mxu0
        %316 = vdwg.mxu0
        %v317 = vmax.f32 %v309, %v314
        %v318 = vrot.slane %v317, 4
        %v319 = vmax.f32 %v317, %v318
        %v320 = vrot.slane %v319, 2
        %v321 = vmax.f32 %v319, %v320
        %v322 = vrot.slane %v321, 1
        %v323 = vmax.f32 %v321, %v322
        %v324 = vsub.f32 %v309, %v323
        %v325 = vsub.f32 %v314, %v323
        %v326 = vmul.f32 %v324, 1.442695
        %v327 = vpow.pop %v326
        %v328 = vmul.f32 %v325, 1.442695
        %v329 = vpow.pop %v328
        %v330 = vadd.f32 %v327, %v329
        %v331 = vrot.slane %v330, 4
        %v332 = vadd.f32 %v330, %v331
        %v333 = vrot.slane %v332, 2
        %v334 = vadd.f32 %v332, %v333
        %v335 = vrot.slane %v334, 1
        %v336 = vadd.f32 %v334, %v335
        %v337 = vrcp.pop %v336
        %v338 = vmul.f32 %v327, %v337
        %v339 = vmul.f32 %v329, %v337
        %v340 = vld [vmem:[%s3] sm:$0xff]
        %v341 = vld [vmem:[%s3 + $0x8] sm:$0xff]
        %v342 = vld [vmem:[%s4] sm:$0xff]
        %v343 = vld [vmem:[%s4 + $0x8] sm:$0xff]
        %345 = vset.pattern.permute.xlu0 0
        %346 = vperm.xlu0 %345, %v342
        %v347 = vpop.permute.xlu0 %346
        %350 = vset.pattern.permute.xlu0 0
        %351 = vperm.xlu0 %350, %v343
        %v352 = vpop.permute.xlu0 %351
        %vm354 = vcmask 130048
        %v356 = vsel %vm354, %v340, 0
        %v359 = vsel %vm354, %v341, 0
        %361 = vmatprep.subr.mxu0 0.0
        %362 = vmatpush1.msra.mxu0 %v338
        %363 = vmatprep.subr.mxu0 0.0
        %364 = vmatpush1.msra.mxu0 %v339
        %365 = vmatprep.subr.mxu0 0.0
        %366 = vmatpush1.msra.mxu0 0.0
        %367 = vmatprep.subr.mxu0 0.0
        %368 = vmatpush1.msra.mxu0 0.0
        %369 = vmatprep.subr.mxu0 0.0
        %370 = vmatpush1.msra.mxu0 0.0
        %371 = vmatprep.subr.mxu0 0.0
        %372 = vmatpush1.msra.mxu0 0.0
        %373 = vmatprep.subr.mxu0 0.0
        %374 = vmatpush1.msra.mxu0 0.0
        %375 = vmatprep.subr.mxu0 0.0
        %376 = vmatpush1.msra.mxu0 0.0
        %377 = vmatprep.subr.mxu0 0.0
        %378 = vmatpush1.msra.mxu0 0.0
        %379 = vmatprep.subr.mxu0 0.0
        %380 = vmatpush1.msra.mxu0 0.0
        %381 = vmatprep.subr.mxu0 0.0
        %382 = vmatpush1.msra.mxu0 0.0
        %383 = vmatprep.subr.mxu0 0.0
        %384 = vmatpush1.msra.mxu0 0.0
        %385 = vmatprep.subr.mxu0 0.0
        %386 = vmatpush1.msra.mxu0 0.0
        %387 = vmatprep.subr.mxu0 0.0
        %388 = vmatpush1.msra.mxu0 0.0
        %389 = vmatprep.subr.mxu0 0.0
        %390 = vmatpush1.msra.mxu0 0.0
        %391 = vmatprep.subr.mxu0 0.0
        %392 = vmatpush1.msra.mxu0 0.0
        %393 = vmatprep.subr.mxu0 0.0
        %394 = vmatpush1.msra.mxu0 0.0
        %395 = vmatprep.subr.mxu0 0.0
        %396 = vmatpush1.msra.mxu0 0.0
        %397 = vmatprep.subr.mxu0 0.0
        %398 = vmatpush1.msra.mxu0 0.0
        %399 = vmatprep.subr.mxu0 0.0
        %400 = vmatpush1.msra.mxu0 0.0
        %401 = vmatprep.subr.mxu0 0.0
        %402 = vmatpush1.msra.mxu0 0.0
        %403 = vmatprep.subr.mxu0 0.0
        %404 = vmatpush1.msra.mxu0 0.0
        %405 = vmatprep.subr.mxu0 0.0
        %406 = vmatpush1.msra.mxu0 0.0
        %407 = vmatprep.subr.mxu0 0.0
        %408 = vmatpush1.msra.mxu0 0.0
        %409 = vmatprep.subr.mxu0 0.0
        %410 = vmatpush1.msra.mxu0 0.0
        %411 = vmatprep.subr.mxu0 0.0
        %412 = vmatpush1.msra.mxu0 0.0
        %413 = vmatprep.subr.mxu0 0.0
        %414 = vmatpush1.msra.mxu0 0.0
        %415 = vmatprep.subr.mxu0 0.0
        %416 = vmatpush1.msra.mxu0 0.0
        %417 = vmatprep.subr.mxu0 0.0
        %418 = vmatpush1.msra.mxu0 0.0
        %419 = vmatprep.subr.mxu0 0.0
        %420 = vmatpush1.msra.mxu0 0.0
        %421 = vmatprep.subr.mxu0 0.0
        %422 = vmatpush1.msra.mxu0 0.0
        %423 = vmatprep.subr.mxu0 0.0
        %424 = vmatpush1.msra.mxu0 0.0
        %425 = vmatprep.mubr.f32.mxu0 0.0
        %426 = vmatmul.mubr.f32.gmra.mrb[0].mxu0 %v356
        %v427 = vpop.f32.mrb[0].mxu0
        %v428 = vadd.f32 %v347, %v427
        %v429 = vpop.f32.mrb[0].mxu0
        %430 = vmatprep.mubr.f32.mxu0 0.0
        %431 = vmatmul.mubr.f32.gmra.mrb[0].mxu0 %v359
        %v432 = vpop.f32.mrb[0].mxu0
        %v433 = vadd.f32 %v352, %v432
        %v434 = vpop.f32.mrb[0].mxu0
        %435 = vdwg.mxu0
        %436 = vst [vmem:[%s215] sm:$0xff] %v428
        %437 = vst [vmem:[%s215 + $0x8] sm:$0xff] %v433
        %s438 = sand.u32 %s137, 1
        %s439 = scalar_lea.sflag [#allocation3], %s438
        %s440 = sand.u32 %s137, 1
        %s441 = smul.addr %s440, 16
        %s442 = scalar_lea.vmem [#allocation2], %s441
        // Predicated region
        $region41: #{tpu_custom_call.1} parent=39 // pred_check
          %p443 = pneg %p147
        $region42: #{tpu_custom_call.1} parent=39 // pred_check_branch
          %445 = sbr.rel (%p443) target = $region44
        $region43: #{tpu_custom_call.1} parent=39 // pred_region
          %s447 = ssub.s32 256, 256
          %448 = vsyncadd %s439, %s447
          %s449 = smul.addr %s19, 128
          %s450 = scalar_lea.hbm %s5, %s449
          %s451 = sshll.u32 %s442, 4
          %s452 = int_to_ptr.vmem [resolvable:$true] %s451
          %457 = dma.vmem_to_hbm [thread:$0]  %s452, 256, %s450, %s439, 128, 384, 8
        $region44: #{tpu_custom_call.1} parent=39 // pred_fallthru
          _
      $region40: #{tpu_custom_call.1} parent=5 // pred_fallthru
        _
      %p458 = scmp.le.s32.totalorder 2, %s14
      // Predicated region
      $region45: #{tpu_custom_call.1} parent=5 // pred_check
        %p459 = pneg %p458
      $region46: #{tpu_custom_call.1} parent=5 // pred_check_branch
        %461 = sbr.rel (%p459) target = $region48
      $region47: #{tpu_custom_call.1} parent=5 // pred_region
        %s462 = ssub.s32 %s14, 2
        // Predicated region
        $region49: #{tpu_custom_call.1} parent=47 // pred_check
          %p463 = pneg %p153
        $region50: #{tpu_custom_call.1} parent=47 // pred_check_branch
          %465 = sbr.rel (%p463) target = $region52
        $region51: #{tpu_custom_call.1} parent=47 // pred_region
          %s466 = sand.u32 %s138, 1
          %s467 = scalar_lea.sflag [#allocation3], %s466
          %s468 = sand.u32 %s138, 1
          %s469 = smul.addr %s468, 16
          %s470 = scalar_lea.vmem [#allocation2], %s469
          %471 = dma.done %s467, 256
        $region52: #{tpu_custom_call.1} parent=47 // pred_fallthru
          _
      $region48: #{tpu_custom_call.1} parent=5 // pred_fallthru
        _
    $region6: #{tpu_custom_call.1} parent=1 // loop_footer
      %s18 = sadd.s32 1, %s14
    $region7: #{tpu_custom_call.1} parent=1 // loop_footer_branch
      %13 = sbr.rel target = $region3
    $region8: #{tpu_custom_call.1} parent=1 // loop_exit
      _
    %472 = vsyncpa [#allocation3], 1
    %s473 = scalar_lea.sflag [#allocation3], 1
    %474 = vsyncpa %s473, 1

</llo_original>
